<compile_context>
chip_gen: v7x
topology: tpu7x:2x2x1
jax: 0.10.0
libtpu: 0.0.40
codegen_flags: <defaults>
</compile_context>

<pallas_src>
import jax
import jax.numpy as jnp
from jax.experimental import pallas as pl
from jax.experimental.pallas import tpu as pltpu


def _round_up(x, m):
    return ((x + m - 1) // m) * m


def fused_head_kernel(x_ref, w_ref, b_ref, o_ref):
    # (tm, 768) bf16 @ (768, num_labels) bf16 -> f32 accumulate, + f32 bias, f32 store.
    o_ref[...] = (
        jnp.dot(x_ref[...], w_ref[...], preferred_element_type=jnp.float32)
        + b_ref[...]
    ).astype(o_ref.dtype)


def fuse_head_params(w1, b1, w2, b2, w3, b3, *, weight_dtype=jnp.bfloat16):
    """Fold Linear(768,512)->Linear(512,256)->Dropout(eval)->Linear(256,nl) into one
    affine map  y = x @ w_fused + b_fused.  Valid because there is no nonlinearity
    between the Linears and dropout is identity in eval mode.

    Call ONCE when weights are bound (hoisted off the per-forward hot path)."""
    # Reassociated small-first: w2 @ w3 is (512, num_labels).
    w23 = w2 @ w3                                       # (512, num_labels)
    w_fused = (w1 @ w23).astype(weight_dtype)           # (768, num_labels)
    b_fused = (b1 @ w23 + b2 @ w3 + b3).astype(jnp.float32)   # (1, num_labels)
    return w_fused, b_fused


def _choose_tm(B, tm_max):
    if B >= 16:
        # At least 2 grid steps so dimension_semantics=("parallel",) can split the
        # batch across both v7x TensorCores; cap at tm_max for VMEM / pipelining.
        return min(tm_max, _round_up(pl.cdiv(B, 2), 8))
    return _round_up(max(B, 1), 8)


def binary_classification_head(x, w_fused, b_fused, *, tm_max=1024,
                               small_batch_threshold=64, force_kernel=False):
    """x: (B, 768) BERT pooler_output. Returns (B, num_labels) f32 logits."""
    B, hidden = x.shape
    num_labels = w_fused.shape[1]
    x_c = x.astype(w_fused.dtype)

    # Tiny batches are dispatch-latency bound: plain XLA fused dot+add wins.
    if B <= small_batch_threshold and not force_kernel:
        return jnp.dot(x_c, w_fused, preferred_element_type=jnp.float32) + b_fused

    tm = _choose_tm(B, tm_max)
    b_pad = _round_up(B, tm)
    if b_pad != B:
        x_c = jnp.pad(x_c, ((0, b_pad - B), (0, 0)))

    grid = (b_pad // tm,)
    wsize = jnp.dtype(w_fused.dtype).itemsize
    flops = 2 * b_pad * hidden * num_labels
    bytes_accessed = (wsize * (b_pad * hidden + hidden * num_labels)
                      + 4 * (num_labels + b_pad * num_labels))

    out = pl.pallas_call(
        fused_head_kernel,
        out_shape=jax.ShapeDtypeStruct((b_pad, num_labels), jnp.float32),
        grid=grid,
        in_specs=[
            pl.BlockSpec((tm, hidden), lambda i: (i, 0)),          # activations: batch-tiled
            pl.BlockSpec((hidden, num_labels), lambda i: (0, 0)),  # fused weight: VMEM-resident
            pl.BlockSpec((1, num_labels), lambda i: (0, 0)),       # fused bias:   VMEM-resident
        ],
        out_specs=pl.BlockSpec((tm, num_labels), lambda i: (i, 0)),
        compiler_params=pltpu.CompilerParams(
            dimension_semantics=("parallel",),
        ),
        cost_estimate=pl.CostEstimate(
            flops=flops, transcendentals=0, bytes_accessed=bytes_accessed),
    )(x_c, w_fused, b_fused)

    return out[:B]


def _init_linear(key, fan_in, fan_out):
    """Deterministic init mimicking torch.nn.Linear (uniform +/- 1/sqrt(fan_in)).
    Weight stored pre-transposed as (fan_in, fan_out); bias (1, fan_out)."""
    kw, kb = jax.random.split(key)
    bound = 1.0 / (fan_in ** 0.5)
    w_t = jax.random.uniform(kw, (fan_in, fan_out), jnp.float32, -bound, bound)
    b = jax.random.uniform(kb, (1, fan_out), jnp.float32, -bound, bound)
    return w_t, b


if __name__ == "__main__":
    key = jax.random.PRNGKey(0)
    k_x, k1, k2, k3 = jax.random.split(key, 4)

    B = 8            # small demo batch
    HIDDEN = 768     # BERT pooler_output width (fixed by the module)
    NUM_LABELS = 2

    # Synthetic stand-in for bert(input_ids, attention_mask).pooler_output
    x = jax.random.normal(k_x, (B, HIDDEN), jnp.float32)

    w1, b1 = _init_linear(k1, 768, 512)          # intermediate_layer1
    w2, b2 = _init_linear(k2, 512, 256)          # intermediate_layer2
    w3, b3 = _init_linear(k3, 256, NUM_LABELS)   # classifier

    # Fold once (this is the "bind weights" step, off the per-forward path).
    w_fused, b_fused = fuse_head_params(w1, b1, w2, b2, w3, b3)

    # Force the Pallas kernel path at this small demo batch (default dispatch
    # would route B=8 through the plain-XLA fallback).
    logits = binary_classification_head(x, w_fused, b_fused, force_kernel=True)
    logits = jax.block_until_ready(logits)

    # Reference 1: identical bf16 math via the plain-XLA small-batch fallback.
    ref_fallback = binary_classification_head(x, w_fused, b_fused)
    # Reference 2: full-precision unfused chain (dropout = eval-mode identity).
    ref_f32 = ((x @ w1 + b1) @ w2 + b2) @ w3 + b3

    assert logits.shape == (B, NUM_LABELS)
    assert jnp.allclose(logits, ref_fallback, atol=2e-3, rtol=2e-3)
    assert jnp.allclose(logits, ref_f32, atol=2e-2, rtol=2e-2)

    print("KERNEL_OK")
</pallas_src>

<mosaic_0001>
module attributes {stable_mosaic.version = 11 : i64} {
  func.func @fused_head_kernel(%arg0: i32, %arg1: memref<8x768xbf16, #tpu.memory_space<vmem>>, %arg2: memref<768x2xbf16, #tpu.memory_space<vmem>>, %arg3: memref<1x2xf32, #tpu.memory_space<vmem>>, %arg4: memref<8x2xf32, #tpu.memory_space<vmem>>) attributes {dimension_semantics = [#tpu.dimension_semantics<parallel>], iteration_bounds = array<i64: 1>, scalar_prefetch = 0 : i64, scratch_operands = 0 : i64, tpu.core_type = #tpu.core_type<tc>, window_params = [{transform_indices = @transform_0, window_bounds = array<i64: 8, 768>}, {pipeline_mode = #tpu.pipeline_mode<synchronous>, transform_indices = @transform_1, window_bounds = array<i64: 768, 2>}, {pipeline_mode = #tpu.pipeline_mode<synchronous>, transform_indices = @transform_2, window_bounds = array<i64: 1, 2>}, {transform_indices = @transform_3, window_bounds = array<i64: 8, 2>}]} {
    %c0 = arith.constant 0 : index
    %c0_0 = arith.constant 0 : index
    %0 = vector.load %arg1[%c0, %c0_0] : memref<8x768xbf16, #tpu.memory_space<vmem>>, vector<8x768xbf16>
    %c0_1 = arith.constant 0 : index
    %c0_2 = arith.constant 0 : index
    %1 = vector.load %arg2[%c0_1, %c0_2] : memref<768x2xbf16, #tpu.memory_space<vmem>>, vector<768x2xbf16>
    %cst = arith.constant dense<0.000000e+00> : vector<8x2xf32>
    %2 = tpu.matmul %0, %1, %cst {dimension_numbers = #tpu.dot_dimension_numbers<[1], [0], [0], [1], [0, 0, 1, 1], [], []>} : vector<8x768xbf16>, vector<768x2xbf16>, vector<8x2xf32> -> vector<8x2xf32>
    %c0_3 = arith.constant 0 : index
    %c0_4 = arith.constant 0 : index
    %3 = vector.load %arg3[%c0_3, %c0_4] : memref<1x2xf32, #tpu.memory_space<vmem>>, vector<1x2xf32>
    %4 = vector.broadcast %3 : vector<1x2xf32> to vector<8x2xf32>
    %5 = arith.addf %2, %4 : vector<8x2xf32>
    %c0_5 = arith.constant 0 : index
    %c0_6 = arith.constant 0 : index
    %6 = vector.load %arg4[%c0_5, %c0_6] : memref<8x2xf32, #tpu.memory_space<vmem>>, vector<8x2xf32>
    tpu.vector_store %arg4[%c0_5, %c0_6], %5 {strides = array<i32>} : memref<8x2xf32, #tpu.memory_space<vmem>>, vector<8x2xf32>,
    return
  }
  func.func @transform_0(%arg0: i32) -> (i32, i32) {
    %c0_i32 = arith.constant 0 : i32
    %c0_i32_0 = arith.constant 0 : i32
    return %arg0, %c0_i32 : i32, i32
  }
  func.func @transform_1(%arg0: i32) -> (i32, i32) {
    %c0_i32 = arith.constant 0 : i32
    %c0_i32_0 = arith.constant 0 : i32
    %c0_i32_1 = arith.constant 0 : i32
    return %c0_i32, %c0_i32_0 : i32, i32
  }
  func.func @transform_2(%arg0: i32) -> (i32, i32) {
    %c0_i32 = arith.constant 0 : i32
    %c0_i32_0 = arith.constant 0 : i32
    %c0_i32_1 = arith.constant 0 : i32
    return %c0_i32, %c0_i32_0 : i32, i32
  }
  func.func @transform_3(%arg0: i32) -> (i32, i32) {
    %c0_i32 = arith.constant 0 : i32
    %c0_i32_0 = arith.constant 0 : i32
    return %arg0, %c0_i32 : i32, i32
  }
}

</mosaic_0001>

<llo_original>
// kernel: tpu_custom_call.1
$region0: #{tpu_custom_call.1}
  #allocation0 [shape = 'u32[]', space=smem, size = 0x4, offset = 0x4, fixed_abs, tag = 'smem constant byte address 0x4 - core index']
  #allocation1 [shape = 'u32[144,128]{1,0:T(1,128)}', space=vmem, size = 0x12000, scoped, tag = 'internal scratch']
  %s0 = inlined_call_operand.vmem [shape: bf16[8,768], index: 0, kind: input, shape index: {}]
  %s1 = inlined_call_operand.vmem [shape: bf16[768,2], index: 1, kind: input, shape index: {}]
  %s2 = inlined_call_operand.vmem [shape: f32[1,2], index: 2, kind: input, shape index: {}]
  %s3 = inlined_call_operand.vmem [shape: f32[8,2], index: 3, kind: output, shape index: {}]
  %s4 = sld [smem:[#allocation0]]
  $region22: #{tpu_custom_call.1} parent=0
    _
  %s6 = ssub.s32 1, %s4
  %s7 = scalar_select 0, %s6, %s4
  // Predicated region
  $region2: #{tpu_custom_call.1} parent=0 // pred_check
    _
  $region3: #{tpu_custom_call.1} parent=0 // pred_check_branch
    %9 = sbr.rel (0) target = $region5
  $region4: #{tpu_custom_call.1} parent=0 // pred_region
    _
  $region5: #{tpu_custom_call.1} parent=0 // pred_fallthru
    _
  // Predicated region
  $region6: #{tpu_custom_call.1} parent=0 // pred_check
    _
  $region7: #{tpu_custom_call.1} parent=0 // pred_check_branch
    %11 = sbr.rel (0) target = $region9
  $region8: #{tpu_custom_call.1} parent=0 // pred_region
    _
  $region9: #{tpu_custom_call.1} parent=0 // pred_fallthru
    _
  // Predicated region
  $region10: #{tpu_custom_call.1} parent=0 // pred_check
    _
  $region11: #{tpu_custom_call.1} parent=0 // pred_check_branch
    %13 = sbr.rel (0) target = $region13
  $region12: #{tpu_custom_call.1} parent=0 // pred_region
    _
  $region13: #{tpu_custom_call.1} parent=0 // pred_fallthru
    _
  %v15 = vld [vmem:[%s0] sm:$0xff]
  %v16 = vld [vmem:[%s0 + $0x8] sm:$0xff]
  %v17 = vld [vmem:[%s0 + $0x10] sm:$0xff]
  %v18 = vld [vmem:[%s1] sm:$0xf]
  %v19 = vld [vmem:[%s1 + $0x4] sm:$0xf]
  %v20 = vld [vmem:[%s1 + $0x8] sm:$0xf]
  %v21 = vld [vmem:[%s1 + $0xc] sm:$0xf]
  %v22 = vld [vmem:[%s1 + $0x10] sm:$0xf]
  %v23 = vld [vmem:[%s1 + $0x14] sm:$0xf]
  %v24 = vld [vmem:[%s1 + $0x18] sm:$0xf]
  %v25 = vld [vmem:[%s1 + $0x1c] sm:$0xf]
  %v26 = vld [vmem:[%s1 + $0x20] sm:$0xf]
  %v27 = vld [vmem:[%s1 + $0x24] sm:$0xf]
  %v28 = vld [vmem:[%s1 + $0x28] sm:$0xf]
  %v29 = vld [vmem:[%s1 + $0x2c] sm:$0xf]
  %v30 = vld [vmem:[%s1 + $0x30] sm:$0xf]
  %v31 = vld [vmem:[%s1 + $0x34] sm:$0xf]
  %v32 = vld [vmem:[%s1 + $0x38] sm:$0xf]
  %v33 = vld [vmem:[%s1 + $0x3c] sm:$0xf]
  %v34 = vld [vmem:[%s1 + $0x40] sm:$0xf]
  %v35 = vld [vmem:[%s1 + $0x44] sm:$0xf]
  %v36 = vld [vmem:[%s1 + $0x48] sm:$0xf]
  %v37 = vld [vmem:[%s1 + $0x4c] sm:$0xf]
  %v38 = vld [vmem:[%s1 + $0x50] sm:$0xf]
  %v39 = vld [vmem:[%s1 + $0x54] sm:$0xf]
  %v40 = vld [vmem:[%s1 + $0x58] sm:$0xf]
  %v41 = vld [vmem:[%s1 + $0x5c] sm:$0xf]
  %v42 = vld [vmem:[%s1 + $0x60] sm:$0xf]
  %v43 = vld [vmem:[%s1 + $0x64] sm:$0xf]
  %v44 = vld [vmem:[%s1 + $0x68] sm:$0xf]
  %v45 = vld [vmem:[%s1 + $0x6c] sm:$0xf]
  %v46 = vld [vmem:[%s1 + $0x70] sm:$0xf]
  %v47 = vld [vmem:[%s1 + $0x74] sm:$0xf]
  %v48 = vld [vmem:[%s1 + $0x78] sm:$0xf]
  %v49 = vld [vmem:[%s1 + $0x7c] sm:$0xf]
  %v50 = vld [vmem:[%s1 + $0x80] sm:$0xf]
  %v51 = vld [vmem:[%s1 + $0x84] sm:$0xf]
  %v52 = vld [vmem:[%s1 + $0x88] sm:$0xf]
  %v53 = vld [vmem:[%s1 + $0x8c] sm:$0xf]
  %v54 = vld [vmem:[%s1 + $0x90] sm:$0xf]
  %v55 = vld [vmem:[%s1 + $0x94] sm:$0xf]
  %v56 = vld [vmem:[%s1 + $0x98] sm:$0xf]
  %v57 = vld [vmem:[%s1 + $0x9c] sm:$0xf]
  %v58 = vld [vmem:[%s1 + $0xa0] sm:$0xf]
  %v59 = vld [vmem:[%s1 + $0xa4] sm:$0xf]
  %v60 = vld [vmem:[%s1 + $0xa8] sm:$0xf]
  %v61 = vld [vmem:[%s1 + $0xac] sm:$0xf]
  %v62 = vld [vmem:[%s1 + $0xb0] sm:$0xf]
  %v63 = vld [vmem:[%s1 + $0xb4] sm:$0xf]
  %v64 = vld [vmem:[%s1 + $0xb8] sm:$0xf]
  %v65 = vld [vmem:[%s1 + $0xbc] sm:$0xf]
  %v66 = vld [vmem:[%s1 + $0xc0] sm:$0xf]
  %v67 = vld [vmem:[%s1 + $0xc4] sm:$0xf]
  %v68 = vld [vmem:[%s1 + $0xc8] sm:$0xf]
  %v69 = vld [vmem:[%s1 + $0xcc] sm:$0xf]
  %v70 = vld [vmem:[%s1 + $0xd0] sm:$0xf]
  %v71 = vld [vmem:[%s1 + $0xd4] sm:$0xf]
  %v72 = vld [vmem:[%s1 + $0xd8] sm:$0xf]
  %v73 = vld [vmem:[%s1 + $0xdc] sm:$0xf]
  %v74 = vld [vmem:[%s1 + $0xe0] sm:$0xf]
  %v75 = vld [vmem:[%s1 + $0xe4] sm:$0xf]
  %v76 = vld [vmem:[%s1 + $0xe8] sm:$0xf]
  %v77 = vld [vmem:[%s1 + $0xec] sm:$0xf]
  %v78 = vld [vmem:[%s1 + $0xf0] sm:$0xf]
  %v79 = vld [vmem:[%s1 + $0xf4] sm:$0xf]
  %v80 = vld [vmem:[%s1 + $0xf8] sm:$0xf]
  %v81 = vld [vmem:[%s1 + $0xfc] sm:$0xf]
  %v82 = vld [vmem:[%s1 + $0x100] sm:$0xf]
  %v83 = vld [vmem:[%s1 + $0x104] sm:$0xf]
  %v84 = vld [vmem:[%s1 + $0x108] sm:$0xf]
  %v85 = vld [vmem:[%s1 + $0x10c] sm:$0xf]
  %v86 = vld [vmem:[%s1 + $0x110] sm:$0xf]
  %v87 = vld [vmem:[%s1 + $0x114] sm:$0xf]
  %v88 = vld [vmem:[%s1 + $0x118] sm:$0xf]
  %v89 = vld [vmem:[%s1 + $0x11c] sm:$0xf]
  %v90 = vld [vmem:[%s1 + $0x120] sm:$0xf]
  %v91 = vld [vmem:[%s1 + $0x124] sm:$0xf]
  %v92 = vld [vmem:[%s1 + $0x128] sm:$0xf]
  %v93 = vld [vmem:[%s1 + $0x12c] sm:$0xf]
  %v94 = vld [vmem:[%s1 + $0x130] sm:$0xf]
  %v95 = vld [vmem:[%s1 + $0x134] sm:$0xf]
  %v96 = vld [vmem:[%s1 + $0x138] sm:$0xf]
  %v97 = vld [vmem:[%s1 + $0x13c] sm:$0xf]
  %v98 = vld [vmem:[%s1 + $0x140] sm:$0xf]
  %v99 = vld [vmem:[%s1 + $0x144] sm:$0xf]
  %v100 = vld [vmem:[%s1 + $0x148] sm:$0xf]
  %v101 = vld [vmem:[%s1 + $0x14c] sm:$0xf]
  %v102 = vld [vmem:[%s1 + $0x150] sm:$0xf]
  %v103 = vld [vmem:[%s1 + $0x154] sm:$0xf]
  %v104 = vld [vmem:[%s1 + $0x158] sm:$0xf]
  %v105 = vld [vmem:[%s1 + $0x15c] sm:$0xf]
  %v106 = vld [vmem:[%s1 + $0x160] sm:$0xf]
  %v107 = vld [vmem:[%s1 + $0x164] sm:$0xf]
  %v108 = vld [vmem:[%s1 + $0x168] sm:$0xf]
  %v109 = vld [vmem:[%s1 + $0x16c] sm:$0xf]
  %v110 = vld [vmem:[%s1 + $0x170] sm:$0xf]
  %v111 = vld [vmem:[%s1 + $0x174] sm:$0xf]
  %v112 = vld [vmem:[%s1 + $0x178] sm:$0xf]
  %v113 = vld [vmem:[%s1 + $0x17c] sm:$0xf]
  %v114 = vld [vmem:[%s2] sm:$0x1]
  %v116 = vlaneseq
  %v117 = vshrl.u32 %v116, 7
  %v118 = vsub.s32 0, %v117
  %v119 = vrot.slane %v114, %v118
  %v124 = vunpack.c.l.b16 %v15
  %v125 = vunpack.c.h.b16 %v15
  %v126 = vunpack.c.l.b16 %v16
  %v127 = vunpack.c.h.b16 %v16
  %v128 = vunpack.c.l.b16 %v17
  %v129 = vunpack.c.h.b16 %v17
  %v130 = vpack.c.b16 %v124, %v124
  %v131 = vpack.c.b16 %v125, %v125
  %v132 = vpack.c.b16 %v126, %v126
  %v133 = vpack.c.b16 %v127, %v127
  %v134 = vpack.c.b16 %v128, %v128
  %v135 = vpack.c.b16 %v129, %v129
  %v238 = vunpack.c.l.b16 %v18
  %v239 = vunpack.c.l.b16 %v19
  %v240 = vunpack.c.l.b16 %v20
  %v241 = vunpack.c.l.b16 %v21
  %v242 = vunpack.c.l.b16 %v22
  %v243 = vunpack.c.l.b16 %v23
  %v244 = vunpack.c.l.b16 %v24
  %v245 = vunpack.c.l.b16 %v25
  %v246 = vunpack.c.l.b16 %v26
  %v247 = vunpack.c.l.b16 %v27
  %v248 = vunpack.c.l.b16 %v28
  %v249 = vunpack.c.l.b16 %v29
  %v250 = vunpack.c.l.b16 %v30
  %v251 = vunpack.c.l.b16 %v31
  %v252 = vunpack.c.l.b16 %v32
  %v253 = vunpack.c.l.b16 %v33
  %v254 = vunpack.c.l.b16 %v34
  %v255 = vunpack.c.l.b16 %v35
  %v256 = vunpack.c.l.b16 %v36
  %v257 = vunpack.c.l.b16 %v37
  %v258 = vunpack.c.l.b16 %v38
  %v259 = vunpack.c.l.b16 %v39
  %v260 = vunpack.c.l.b16 %v40
  %v261 = vunpack.c.l.b16 %v41
  %v262 = vunpack.c.l.b16 %v42
  %v263 = vunpack.c.l.b16 %v43
  %v264 = vunpack.c.l.b16 %v44
  %v265 = vunpack.c.l.b16 %v45
  %v266 = vunpack.c.l.b16 %v46
  %v267 = vunpack.c.l.b16 %v47
  %v268 = vunpack.c.l.b16 %v48
  %v269 = vunpack.c.l.b16 %v49
  %v270 = vunpack.c.l.b16 %v50
  %v271 = vunpack.c.l.b16 %v51
  %v272 = vunpack.c.l.b16 %v52
  %v273 = vunpack.c.l.b16 %v53
  %v274 = vunpack.c.l.b16 %v54
  %v275 = vunpack.c.l.b16 %v55
  %v276 = vunpack.c.l.b16 %v56
  %v277 = vunpack.c.l.b16 %v57
  %v278 = vunpack.c.l.b16 %v58
  %v279 = vunpack.c.l.b16 %v59
  %v280 = vunpack.c.l.b16 %v60
  %v281 = vunpack.c.l.b16 %v61
  %v282 = vunpack.c.l.b16 %v62
  %v283 = vunpack.c.l.b16 %v63
  %v284 = vunpack.c.l.b16 %v64
  %v285 = vunpack.c.l.b16 %v65
  %v286 = vunpack.c.l.b16 %v66
  %v287 = vunpack.c.l.b16 %v67
  %v288 = vunpack.c.l.b16 %v68
  %v289 = vunpack.c.l.b16 %v69
  %v290 = vunpack.c.l.b16 %v70
  %v291 = vunpack.c.l.b16 %v71
  %v292 = vunpack.c.l.b16 %v72
  %v293 = vunpack.c.l.b16 %v73
  %v294 = vunpack.c.l.b16 %v74
  %v295 = vunpack.c.l.b16 %v75
  %v296 = vunpack.c.l.b16 %v76
  %v297 = vunpack.c.l.b16 %v77
  %v298 = vunpack.c.l.b16 %v78
  %v299 = vunpack.c.l.b16 %v79
  %v300 = vunpack.c.l.b16 %v80
  %v301 = vunpack.c.l.b16 %v81
  %v302 = vunpack.c.l.b16 %v82
  %v303 = vunpack.c.l.b16 %v83
  %v304 = vunpack.c.l.b16 %v84
  %v305 = vunpack.c.l.b16 %v85
  %v306 = vunpack.c.l.b16 %v86
  %v307 = vunpack.c.l.b16 %v87
  %v308 = vunpack.c.l.b16 %v88
  %v309 = vunpack.c.l.b16 %v89
  %v310 = vunpack.c.l.b16 %v90
  %v311 = vunpack.c.l.b16 %v91
  %v312 = vunpack.c.l.b16 %v92
  %v313 = vunpack.c.l.b16 %v93
  %v314 = vunpack.c.l.b16 %v94
  %v315 = vunpack.c.l.b16 %v95
  %v316 = vunpack.c.l.b16 %v96
  %v317 = vunpack.c.l.b16 %v97
  %v318 = vunpack.c.l.b16 %v98
  %v319 = vunpack.c.l.b16 %v99
  %v320 = vunpack.c.l.b16 %v100
  %v321 = vunpack.c.l.b16 %v101
  %v322 = vunpack.c.l.b16 %v102
  %v323 = vunpack.c.l.b16 %v103
  %v324 = vunpack.c.l.b16 %v104
  %v325 = vunpack.c.l.b16 %v105
  %v326 = vunpack.c.l.b16 %v106
  %v327 = vunpack.c.l.b16 %v107
  %v328 = vunpack.c.l.b16 %v108
  %v329 = vunpack.c.l.b16 %v109
  %v330 = vunpack.c.l.b16 %v110
  %v331 = vunpack.c.l.b16 %v111
  %v332 = vunpack.c.l.b16 %v112
  %v333 = vunpack.c.l.b16 %v113
  %v334 = vpack.c.b16 %v239, %v238
  %v335 = vpack.c.b16 %v241, %v240
  %v336 = vpack.c.b16 %v243, %v242
  %v337 = vpack.c.b16 %v245, %v244
  %v338 = vpack.c.b16 %v247, %v246
  %v339 = vpack.c.b16 %v249, %v248
  %v340 = vpack.c.b16 %v251, %v250
  %v341 = vpack.c.b16 %v253, %v252
  %v342 = vpack.c.b16 %v255, %v254
  %v343 = vpack.c.b16 %v257, %v256
  %v344 = vpack.c.b16 %v259, %v258
  %v345 = vpack.c.b16 %v261, %v260
  %v346 = vpack.c.b16 %v263, %v262
  %v347 = vpack.c.b16 %v265, %v264
  %v348 = vpack.c.b16 %v267, %v266
  %v349 = vpack.c.b16 %v269, %v268
  %v350 = vpack.c.b16 %v271, %v270
  %v351 = vpack.c.b16 %v273, %v272
  %v352 = vpack.c.b16 %v275, %v274
  %v353 = vpack.c.b16 %v277, %v276
  %v354 = vpack.c.b16 %v279, %v278
  %v355 = vpack.c.b16 %v281, %v280
  %v356 = vpack.c.b16 %v283, %v282
  %v357 = vpack.c.b16 %v285, %v284
  %v358 = vpack.c.b16 %v287, %v286
  %v359 = vpack.c.b16 %v289, %v288
  %v360 = vpack.c.b16 %v291, %v290
  %v361 = vpack.c.b16 %v293, %v292
  %v362 = vpack.c.b16 %v295, %v294
  %v363 = vpack.c.b16 %v297, %v296
  %v364 = vpack.c.b16 %v299, %v298
  %v365 = vpack.c.b16 %v301, %v300
  %v366 = vpack.c.b16 %v303, %v302
  %v367 = vpack.c.b16 %v305, %v304
  %v368 = vpack.c.b16 %v307, %v306
  %v369 = vpack.c.b16 %v309, %v308
  %v370 = vpack.c.b16 %v311, %v310
  %v371 = vpack.c.b16 %v313, %v312
  %v372 = vpack.c.b16 %v315, %v314
  %v373 = vpack.c.b16 %v317, %v316
  %v374 = vpack.c.b16 %v319, %v318
  %v375 = vpack.c.b16 %v321, %v320
  %v376 = vpack.c.b16 %v323, %v322
  %v377 = vpack.c.b16 %v325, %v324
  %v378 = vpack.c.b16 %v327, %v326
  %v379 = vpack.c.b16 %v329, %v328
  %v380 = vpack.c.b16 %v331, %v330
  %v381 = vpack.c.b16 %v333, %v332
  %430 = vmatprep.subr.bf16.mxu0 0
  %431 = vmatpush1.bf16.msra.mxu0 %v334
  %432 = vmatprep.subr.bf16.mxu0 0
  %433 = vmatpush1.bf16.msra.mxu0 %v335
  %434 = vmatprep.subr.bf16.mxu0 0
  %435 = vmatpush1.bf16.msra.mxu0 %v336
  %436 = vmatprep.subr.bf16.mxu0 0
  %437 = vmatpush1.bf16.msra.mxu0 %v337
  %438 = vmatprep.subr.bf16.mxu0 0
  %439 = vmatpush1.bf16.msra.mxu0 %v338
  %440 = vmatprep.subr.bf16.mxu0 0
  %441 = vmatpush1.bf16.msra.mxu0 %v339
  %442 = vmatprep.subr.bf16.mxu0 0
  %443 = vmatpush1.bf16.msra.mxu0 %v340
  %444 = vmatprep.subr.bf16.mxu0 0
  %445 = vmatpush1.bf16.msra.mxu0 %v341
  %446 = vmatprep.subr.bf16.mxu0 0
  %447 = vmatpush1.bf16.msra.mxu0 %v342
  %448 = vmatprep.subr.bf16.mxu0 0
  %449 = vmatpush1.bf16.msra.mxu0 %v343
  %450 = vmatprep.subr.bf16.mxu0 0
  %451 = vmatpush1.bf16.msra.mxu0 %v344
  %452 = vmatprep.subr.bf16.mxu0 0
  %453 = vmatpush1.bf16.msra.mxu0 %v345
  %454 = vmatprep.subr.bf16.mxu0 0
  %455 = vmatpush1.bf16.msra.mxu0 %v346
  %456 = vmatprep.subr.bf16.mxu0 0
  %457 = vmatpush1.bf16.msra.mxu0 %v347
  %458 = vmatprep.subr.bf16.mxu0 0
  %459 = vmatpush1.bf16.msra.mxu0 %v348
  %460 = vmatprep.subr.bf16.mxu0 0
  %461 = vmatpush1.bf16.msra.mxu0 %v349
  %462 = vmatprep.mubr.bf16.mxu0 %v131
  %463 = vmatmul.mubr.bf16.gmra.mrb[0].mxu0 %v130
  %v464 = vpop.f32.mrb[0].mxu0
  %v465 = vadd.f32 %v119, %v464
  %v466 = vpop.f32.mrb[0].mxu0
  %v467 = vpop.f32.mrb[0].mxu0
  %v468 = vpop.f32.mrb[0].mxu0
  %469 = vdwg.mxu0
  %470 = vmatprep.subr.bf16.mxu0 0
  %471 = vmatpush1.bf16.msra.mxu0 %v350
  %472 = vmatprep.subr.bf16.mxu0 0
  %473 = vmatpush1.bf16.msra.mxu0 %v351
  %474 = vmatprep.subr.bf16.mxu0 0
  %475 = vmatpush1.bf16.msra.mxu0 %v352
  %476 = vmatprep.subr.bf16.mxu0 0
  %477 = vmatpush1.bf16.msra.mxu0 %v353
  %478 = vmatprep.subr.bf16.mxu0 0
  %479 = vmatpush1.bf16.msra.mxu0 %v354
  %480 = vmatprep.subr.bf16.mxu0 0
  %481 = vmatpush1.bf16.msra.mxu0 %v355
  %482 = vmatprep.subr.bf16.mxu0 0
  %483 = vmatpush1.bf16.msra.mxu0 %v356
  %484 = vmatprep.subr.bf16.mxu0 0
  %485 = vmatpush1.bf16.msra.mxu0 %v357
  %486 = vmatprep.subr.bf16.mxu0 0
  %487 = vmatpush1.bf16.msra.mxu0 %v358
  %488 = vmatprep.subr.bf16.mxu0 0
  %489 = vmatpush1.bf16.msra.mxu0 %v359
  %490 = vmatprep.subr.bf16.mxu0 0
  %491 = vmatpush1.bf16.msra.mxu0 %v360
  %492 = vmatprep.subr.bf16.mxu0 0
  %493 = vmatpush1.bf16.msra.mxu0 %v361
  %494 = vmatprep.subr.bf16.mxu0 0
  %495 = vmatpush1.bf16.msra.mxu0 %v362
  %496 = vmatprep.subr.bf16.mxu0 0
  %497 = vmatpush1.bf16.msra.mxu0 %v363
  %498 = vmatprep.subr.bf16.mxu0 0
  %499 = vmatpush1.bf16.msra.mxu0 %v364
  %500 = vmatprep.subr.bf16.mxu0 0
  %501 = vmatpush1.bf16.msra.mxu0 %v365
  %502 = vmatprep.mubr.bf16.mxu0 %v133
  %503 = vmatmul.mubr.bf16.gmra.mrb[0].mxu0 %v132
  %v504 = vpop.f32.mrb[0].mxu0
  %v505 = vadd.f32 %v465, %v504
  %v506 = vpop.f32.mrb[0].mxu0
  %v507 = vpop.f32.mrb[0].mxu0
  %v508 = vpop.f32.mrb[0].mxu0
  %509 = vdwg.mxu0
  %510 = vmatprep.subr.bf16.mxu0 0
  %511 = vmatpush1.bf16.msra.mxu0 %v366
  %512 = vmatprep.subr.bf16.mxu0 0
  %513 = vmatpush1.bf16.msra.mxu0 %v367
  %514 = vmatprep.subr.bf16.mxu0 0
  %515 = vmatpush1.bf16.msra.mxu0 %v368
  %516 = vmatprep.subr.bf16.mxu0 0
  %517 = vmatpush1.bf16.msra.mxu0 %v369
  %518 = vmatprep.subr.bf16.mxu0 0
  %519 = vmatpush1.bf16.msra.mxu0 %v370
  %520 = vmatprep.subr.bf16.mxu0 0
  %521 = vmatpush1.bf16.msra.mxu0 %v371
  %522 = vmatprep.subr.bf16.mxu0 0
  %523 = vmatpush1.bf16.msra.mxu0 %v372
  %524 = vmatprep.subr.bf16.mxu0 0
  %525 = vmatpush1.bf16.msra.mxu0 %v373
  %526 = vmatprep.subr.bf16.mxu0 0
  %527 = vmatpush1.bf16.msra.mxu0 %v374
  %528 = vmatprep.subr.bf16.mxu0 0
  %529 = vmatpush1.bf16.msra.mxu0 %v375
  %530 = vmatprep.subr.bf16.mxu0 0
  %531 = vmatpush1.bf16.msra.mxu0 %v376
  %532 = vmatprep.subr.bf16.mxu0 0
  %533 = vmatpush1.bf16.msra.mxu0 %v377
  %534 = vmatprep.subr.bf16.mxu0 0
  %535 = vmatpush1.bf16.msra.mxu0 %v378
  %536 = vmatprep.subr.bf16.mxu0 0
  %537 = vmatpush1.bf16.msra.mxu0 %v379
  %538 = vmatprep.subr.bf16.mxu0 0
  %539 = vmatpush1.bf16.msra.mxu0 %v380
  %540 = vmatprep.subr.bf16.mxu0 0
  %541 = vmatpush1.bf16.msra.mxu0 %v381
  %542 = vmatprep.mubr.bf16.mxu0 %v135
  %543 = vmatmul.mubr.bf16.gmra.mrb[0].mxu0 %v134
  %v544 = vpop.f32.mrb[0].mxu0
  %v545 = vadd.f32 %v505, %v544
  %v546 = vpop.f32.mrb[0].mxu0
  %v547 = vpop.f32.mrb[0].mxu0
  %v548 = vpop.f32.mrb[0].mxu0
  %549 = vdwg.mxu0
  %vm550 = vcmask 15360
  %551 = vst.msk [vmem:[%s3] sm:$0xff] %vm550, %v545
  // Predicated region
  $region14: #{tpu_custom_call.1} parent=0 // pred_check
    _
  $region15: #{tpu_custom_call.1} parent=0 // pred_check_branch
    %553 = sbr.rel (0) target = $region17
  $region16: #{tpu_custom_call.1} parent=0 // pred_region
    _
  $region17: #{tpu_custom_call.1} parent=0 // pred_fallthru
    _
  // Predicated region
  $region18: #{tpu_custom_call.1} parent=0 // pred_check
    _
  $region19: #{tpu_custom_call.1} parent=0 // pred_check_branch
    %555 = sbr.rel (0) target = $region21
  $region20: #{tpu_custom_call.1} parent=0 // pred_region
    _
  $region21: #{tpu_custom_call.1} parent=0 // pred_fallthru
    _

</llo_original>
